<compile_context>
chip_gen: v5e
topology: v5e:2x2
jax: 0.10.0
libtpu: 0.0.40
codegen_flags: <defaults>
</compile_context>

<pallas_src>
import functools
import itertools

import numpy as np
import jax
import jax.numpy as jnp
from jax import lax
from jax.experimental import pallas as pl
from jax.experimental.pallas import tpu as pltpu

_NEG = -1.0e4                      # mask-logit pad: sigmoid -> 0, softplus -> 0 exactly
_VMEM_LIMIT = 32 * 1024 * 1024     # explicit scoped-VMEM limit, safe on v5e/v6e/v7x


def _round_up(x, m):
    return (x + m - 1) // m * m


def _choose_hw_tiling(hw, max_tile=8192):
    """Pick (HW_pad, tile_hw) with minimal padding and few, large HW tiles.

    tile_hw always divides HW_pad exactly, so no tail masking is needed and
    only the alignment padding (<=1023 columns) is ever streamed from HBM.
    """
    best = None
    for align in (128, 256, 512, 1024):
        hw_pad = _round_up(hw, align)
        tile, t = 128, 128
        lim = min(hw_pad, max_tile)
        while t <= lim:
            if hw_pad % t == 0:
                tile = t
            t += 128
        # streamed columns + ~256-column equivalent per extra grid step
        score = hw_pad + 256 * (hw_pad // tile)
        if best is None or score < best[0]:
            best = (score, hw_pad, tile)
    return best[1], best[2]


# ----------------------------------------------------------------------------
# Kernel 1: batched matching-cost matrices  (B, Q_pad, N_pad)
# ----------------------------------------------------------------------------
def _cost_kernel(mask_logits_ref, tgt_ref, cls_logits_ref, onehot_ref, cost_ref,
                 *, inv_hw):
    k = pl.program_id(1)

    @pl.when(k == 0)
    def _():
        cost_ref[...] = jnp.zeros_like(cost_ref)

    x_bf = mask_logits_ref[...]                       # (Q_pad, thw) bf16 (HBM stream)
    x = x_bf.astype(jnp.float32)
    # softplus(x) = -log(1 - sigmoid(x)); exactly 0 for the -1e4 padding
    sp = jnp.maximum(x, 0.0) + jnp.log(1.0 + jnp.exp(-jnp.abs(x)))
    sp_row = jnp.sum(sp, axis=1, keepdims=True)       # (Q_pad, 1)   XLU reduce

    dn = (((1,), (1,)), ((), ()))
    # single bf16 MXU matmul: (Q_pad, thw) x (N_pad, thw)^T, f32 accumulation
    xt = lax.dot_general(x_bf, tgt_ref[...], dn, preferred_element_type=jnp.float32)
    # sum_hw [softplus(x) - t*x], accumulated over HW tiles
    cost_ref[...] += sp_row - xt

    @pl.when(k == pl.num_programs(1) - 1)
    def _():
        logits = cls_logits_ref[...]                  # (Q_pad, C+1) f32, tiny
        m = jnp.max(logits, axis=-1, keepdims=True)
        e = jnp.exp(logits - m)
        probs = e / jnp.sum(e, axis=-1, keepdims=True)          # exact division
        # full-width one-hot (zero "no-object" column) -> no unaligned slice
        cost_class = -lax.dot_general(probs, onehot_ref[...], dn,
                                      preferred_element_type=jnp.float32)
        cost_ref[...] = cost_ref[...] * inv_hw + cost_class


def compute_cost_matrices(mask_logits_p, tgt_p, cls_logits_p, onehot_p,
                          tile_hw, inv_hw):
    B, Q_pad, HW_pad = mask_logits_p.shape
    N_pad = tgt_p.shape[1]
    C1 = cls_logits_p.shape[-1]
    n_hw_tiles = HW_pad // tile_hw
    # TODO(synk): for B == 1 on v7x, split the HW reduction into two "parallel"
    #             halves (partial cost matrices summed in XLA) so the second
    #             TensorCore is not idle.
    return pl.pallas_call(
        functools.partial(_cost_kernel, inv_hw=inv_hw),
        out_shape=jax.ShapeDtypeStruct((B, Q_pad, N_pad), jnp.float32),
        grid=(B, n_hw_tiles),
        in_specs=[
            pl.BlockSpec((None, Q_pad, tile_hw), lambda b, k: (b, 0, k)),
            pl.BlockSpec((None, N_pad, tile_hw), lambda b, k: (b, 0, k)),
            pl.BlockSpec((None, Q_pad, C1), lambda b, k: (b, 0, 0)),
            pl.BlockSpec((None, N_pad, C1), lambda b, k: (b, 0, 0)),
        ],
        out_specs=pl.BlockSpec((None, Q_pad, N_pad), lambda b, k: (b, 0, 0)),
        compiler_params=pltpu.CompilerParams(
            dimension_semantics=("parallel", "arbitrary"),
            vmem_limit_bytes=_VMEM_LIMIT),
    )(mask_logits_p, tgt_p, cls_logits_p, onehot_p)


# ----------------------------------------------------------------------------
# Kernel 2: batched CE / dice / BCE over all matched pairs
#   per-row-tile partials (summed in the wrapper):
#     [sum_i ce_i, sum_rows w*dice, sum_i bce_i, sum_empty ce_i]
# ----------------------------------------------------------------------------
def _loss_kernel(cls_ref, oh_w_ref, oh_we_ref, x_ref, t_ref, wmask_ref, tsum_ref,
                 out_ref, inter_acc, psum_acc, bce_acc, *, inv_hw):
    r = pl.program_id(0)
    k = pl.program_id(1)

    @pl.when(k == 0)
    def _():
        inter_acc[...] = jnp.zeros_like(inter_acc)
        psum_acc[...] = jnp.zeros_like(psum_acc)
        bce_acc[...] = jnp.zeros_like(bce_acc)

    x = x_ref[...].astype(jnp.float32)                # (row_tile, thw) from bf16
    t = t_ref[...].astype(jnp.float32)
    u = jnp.exp(-jnp.abs(x))                          # one EUP exp per element
    sp = jnp.maximum(x, 0.0) + jnp.log(1.0 + u)       # softplus(x)
    # sigmoid(x) reusing u (no extra exp)
    p = jnp.where(x >= 0.0, 1.0, u) * pl.reciprocal(1.0 + u, approx=True)
    inter_acc[...] += jnp.sum(p * t, axis=1, keepdims=True)
    psum_acc[...] += jnp.sum(p, axis=1, keepdims=True)
    # BCE with logits: -(t*log p + (1-t)*log(1-p)) = softplus(x) - t*x
    bce_acc[...] += jnp.sum(sp - t * x, axis=1, keepdims=True)

    @pl.when(k == pl.num_programs(1) - 1)
    def _():
        w = wmask_ref[...]                            # (row_tile, 1) per-row 1/N_i
        dice = (2.0 * inter_acc[...] + 1.0) / (psum_acc[...] + tsum_ref[...] + 1.0)
        dice_sum = jnp.sum(w * dice)
        bce_sum = jnp.sum(w * bce_acc[...]) * inv_hw

        # cross entropy (weights folded into the one-hot matrices); the cls
        # arrays are passed untiled, so only the first row tile contributes.
        is_r0 = (r == 0).astype(jnp.float32)
        logits = cls_ref[...]
        m = jnp.max(logits, axis=-1, keepdims=True)
        shifted = logits - m
        logz = jnp.log(jnp.sum(jnp.exp(shifted), axis=-1, keepdims=True))
        log_sm = shifted - logz
        ce_sum = -jnp.sum(log_sm * oh_w_ref[...]) * is_r0
        ce_empty_sum = -jnp.sum(log_sm * oh_we_ref[...]) * is_r0

        sub = lax.broadcasted_iota(jnp.int32, (8, 128), 0)
        out_ref[...] = (jnp.where(sub == 0, ce_sum, 0.0)
                        + jnp.where(sub == 1, dice_sum, 0.0)
                        + jnp.where(sub == 2, bce_sum, 0.0)
                        + jnp.where(sub == 3, ce_empty_sum, 0.0))


def compute_losses(logits_m, onehot_w, onehot_we, maskl_m, tgt_m, wmask_m, tsum_m,
                   tile_hw, inv_hw, n_row_tiles):
    R_ce_pad, C1 = logits_m.shape
    R_mask_pad, HW_pad = maskl_m.shape
    row_tile = R_mask_pad // n_row_tiles
    n_hw_tiles = HW_pad // tile_hw
    out = pl.pallas_call(
        functools.partial(_loss_kernel, inv_hw=inv_hw),
        out_shape=jax.ShapeDtypeStruct((n_row_tiles, 8, 128), jnp.float32),
        grid=(n_row_tiles, n_hw_tiles),
        in_specs=[
            pl.BlockSpec((R_ce_pad, C1), lambda r, k: (0, 0)),
            pl.BlockSpec((R_ce_pad, C1), lambda r, k: (0, 0)),
            pl.BlockSpec((R_ce_pad, C1), lambda r, k: (0, 0)),
            pl.BlockSpec((row_tile, tile_hw), lambda r, k: (r, k)),
            pl.BlockSpec((row_tile, tile_hw), lambda r, k: (r, k)),
            pl.BlockSpec((row_tile, 1), lambda r, k: (r, 0)),
            pl.BlockSpec((row_tile, 1), lambda r, k: (r, 0)),
        ],
        out_specs=pl.BlockSpec((None, 8, 128), lambda r, k: (r, 0, 0)),
        scratch_shapes=[pltpu.VMEM((row_tile, 1), jnp.float32) for _ in range(3)],
        compiler_params=pltpu.CompilerParams(
            dimension_semantics=("parallel", "arbitrary"),
            vmem_limit_bytes=_VMEM_LIMIT),
    )(logits_m, onehot_w, onehot_we, maskl_m, tgt_m, wmask_m, tsum_m)
    # sublane j, any lane, holds partial j
    return jnp.sum(out[:, :4, 0], axis=0)


# ----------------------------------------------------------------------------
# Host-side Hungarian matching (exact brute force; fine for tiny Q).
# TODO(synk): replace with scipy.optimize.linear_sum_assignment for real Q~100;
#             combinatorial host work, no Pallas equivalent.
# ----------------------------------------------------------------------------
def _linear_sum_assignment_bruteforce(cost):
    cost = np.asarray(cost, dtype=np.float64)
    Q, N = cost.shape
    assert Q >= N, "expected at least as many queries as targets"
    cols = np.arange(N)
    best_rows, best_cost = None, np.inf
    for rows in itertools.permutations(range(Q), N):
        c = cost[list(rows), cols].sum()
        if c < best_cost:
            best_cost, best_rows = c, rows
    return np.asarray(best_rows, dtype=np.int64), cols


# ----------------------------------------------------------------------------
# Mask2FormerLoss forward
# ----------------------------------------------------------------------------
def mask2former_loss(outputs, targets, num_classes,
                     ce_weight=1.0, dice_weight=1.0, bce_weight=1.0):
    pred_logits = jnp.asarray(outputs["pred_logits"], jnp.float32)   # (B, Q, C+1)
    pred_masks = jnp.asarray(outputs["pred_masks"], jnp.float32)     # (B, Q, H, W)
    B, Q, C1 = pred_logits.shape
    H, W = pred_masks.shape[-2:]
    HW = H * W
    inv_hw = 1.0 / HW

    HW_pad, tile_hw = _choose_hw_tiling(HW)
    Q_pad = _round_up(Q, 16)                     # bf16 sublane packing

    # ---------- host-side target parsing (numpy, single pass) ----------
    labels_np, masks_np, n_per_image = [], [], []
    for tgt in targets:
        lab = np.asarray(tgt["labels"]).astype(np.int64).reshape(-1)
        n = int(lab.shape[0])
        m = (np.asarray(tgt["masks"], dtype=np.float32).reshape(n, HW)
             if n > 0 else np.zeros((0, HW), np.float32))
        labels_np.append(lab)
        masks_np.append(m)
        n_per_image.append(n)
    max_n = max(n_per_image) if n_per_image else 0
    N_pad = _round_up(max(max_n, 1), 16)         # data-dependent target padding

    # padded targets / one-hots assembled fully on host -> ONE transfer each
    tgt_np = np.zeros((B, N_pad, HW_pad), np.float32)
    onehot_np = np.zeros((B, N_pad, C1), np.float32)
    for i in range(B):
        n = n_per_image[i]
        if n > 0:
            tgt_np[i, :n, :HW] = masks_np[i]
            onehot_np[i, np.arange(n), labels_np[i]] = 1.0
    tgt_p = jnp.asarray(tgt_np, dtype=jnp.bfloat16)      # 0/1 masks: bf16 exact
    onehot_p = jnp.asarray(onehot_np)

    # bf16 mask logits: dominant HBM stream of both kernels (halves bandwidth).
    # NOTE: matching costs therefore carry bf16 precision; near-tied
    # assignments may differ from an all-f32 reference.
    mask_logits_p = jnp.pad(
        pred_masks.reshape(B, Q, HW).astype(jnp.bfloat16),
        ((0, 0), (0, Q_pad - Q), (0, HW_pad - HW)), constant_values=_NEG)
    cls_logits_p = jnp.pad(pred_logits, ((0, 0), (0, Q_pad - Q), (0, 0)))

    # ---------- Pallas kernel 1: all B cost matrices, one launch ----------
    cost_all = compute_cost_matrices(mask_logits_p, tgt_p, cls_logits_p, onehot_p,
                                     tile_hw, inv_hw)
    cost_host = np.asarray(jax.device_get(cost_all))     # single host sync

    # ---------- host Hungarian matching + matched-row index assembly ----------
    mrow_img, mrow_q, mrow_t = [], [], []      # matched (image, query, target) rows
    ce_img, ce_q = [], []                      # CE rows: matched + empty-image rows
    ohw_rows, ohwe_rows = [], []               # per-row CE one-hot weights
    wmask_list, tsum_list = [], []
    n_nonempty = 0
    for i in range(B):
        n = n_per_image[i]
        if n == 0:
            continue
        n_nonempty += 1
        row_ind, col_ind = _linear_sum_assignment_bruteforce(cost_host[i, :Q, :n])
        mrow_img.extend([i] * n)
        mrow_q.extend(int(r) for r in row_ind)
        mrow_t.extend(int(c) for c in col_ind)
        ce_img.extend([i] * n)
        ce_q.extend(int(r) for r in row_ind)
        lab = labels_np[i][col_ind]
        ohw = np.zeros((n, C1), np.float32)
        ohw[np.arange(n), lab] = 1.0 / n                  # CE mean over the n rows
        ohw_rows.append(ohw)
        ohwe_rows.append(np.zeros((n, C1), np.float32))
        wmask_list.extend([1.0 / n] * n)                  # dice/BCE per-image 1/N
        tsum_list.extend(masks_np[i][col_ind].sum(axis=1).tolist())
    for i in range(B):                                    # empty images: CE-only rows
        if n_per_image[i] == 0:
            ce_img.extend([i] * Q)
            ce_q.extend(range(Q))
            ohe = np.zeros((Q, C1), np.float32)
            ohe[:, C1 - 1] = 1.0 / Q                      # "no object" class, mean over Q
            ohwe_rows.append(ohe)
            ohw_rows.append(np.zeros((Q, C1), np.float32))

    R_mask = len(mrow_img)
    R_ce = len(ce_img)
    # row-parallel split of the mask-loss reduction (feeds both v7x TensorCores)
    n_row_tiles = 2 if R_mask > 16 else 1
    R_mask_pad = _round_up(max(R_mask, 1), 16 * n_row_tiles)
    row_tile_unused = R_mask_pad // n_row_tiles  # noqa: F841 (documenting the split)
    R_ce_pad = _round_up(max(R_ce, 1), 8)

    if R_mask > 0:
        ii = jnp.asarray(np.asarray(mrow_img, np.int32))
        qq = jnp.asarray(np.asarray(mrow_q, np.int32))
        tt = jnp.asarray(np.asarray(mrow_t, np.int32))
        maskl_m = jnp.pad(mask_logits_p[ii, qq],
                          ((0, R_mask_pad - R_mask), (0, 0)), constant_values=_NEG)
        tgt_m = jnp.pad(tgt_p[ii, tt], ((0, R_mask_pad - R_mask), (0, 0)))
    else:
        maskl_m = jnp.full((R_mask_pad, HW_pad), _NEG, jnp.bfloat16)
        tgt_m = jnp.zeros((R_mask_pad, HW_pad), jnp.bfloat16)

    ci = jnp.asarray(np.asarray(ce_img, np.int32))
    cq = jnp.asarray(np.asarray(ce_q, np.int32))
    logits_m = jnp.pad(pred_logits[ci, cq], ((0, R_ce_pad - R_ce), (0, 0)))

    onehot_w_np = np.zeros((R_ce_pad, C1), np.float32)
    onehot_we_np = np.zeros((R_ce_pad, C1), np.float32)
    if R_ce > 0:
        onehot_w_np[:R_ce] = np.concatenate(ohw_rows, axis=0)
        onehot_we_np[:R_ce] = np.concatenate(ohwe_rows, axis=0)
    wmask_np = np.zeros((R_mask_pad, 1), np.float32)
    tsum_np = np.zeros((R_mask_pad, 1), np.float32)
    if R_mask > 0:
        wmask_np[:R_mask, 0] = np.asarray(wmask_list, np.float32)
        tsum_np[:R_mask, 0] = np.asarray(tsum_list, np.float32)

    # ---------- Pallas kernel 2: CE / dice / BCE sums, one launch ----------
    sums = compute_losses(logits_m, jnp.asarray(onehot_w_np), jnp.asarray(onehot_we_np),
                          maskl_m, tgt_m, jnp.asarray(wmask_np), jnp.asarray(tsum_np),
                          tile_hw, inv_hw, n_row_tiles)

    total_loss_ce = sums[0]
    total_loss_dice = float(n_nonempty) - sums[1]
    total_loss_bce = sums[2]
    ce_empty = sums[3]               # unweighted, matches the reference's N==0 branch

    total_loss = (ce_weight * total_loss_ce + dice_weight * total_loss_dice
                  + bce_weight * total_loss_bce + ce_empty)
    return total_loss / B, total_loss_ce / B, total_loss_dice / B


# ----------------------------------------------------------------------------
if __name__ == "__main__":
    key = jax.random.PRNGKey(0)
    B, Q, C, H, W = 2, 8, 5, 16, 16
    C1 = C + 1

    k1, k2, k3, k4, k5, k6 = jax.random.split(key, 6)
    pred_logits = jax.random.normal(k1, (B, Q, C1), dtype=jnp.float32)
    pred_masks = jax.random.normal(k2, (B, Q, H, W), dtype=jnp.float32)

    # batch 0: 3 objects, batch 1: 2 objects
    targets = [
        {
            "labels": jax.random.randint(k3, (3,), 0, C, dtype=jnp.int32),
            "masks": (jax.random.uniform(k4, (3, H, W)) > 0.5).astype(jnp.float32),
        },
        {
            "labels": jax.random.randint(k5, (2,), 0, C, dtype=jnp.int32),
            "masks": (jax.random.uniform(k6, (2, H, W)) > 0.5).astype(jnp.float32),
        },
    ]

    outputs = {"pred_logits": pred_logits, "pred_masks": pred_masks}
    total, total_ce, total_dice = mask2former_loss(outputs, targets, num_classes=C)
    jax.block_until_ready((total, total_ce, total_dice))
    assert np.isfinite(float(total))
    assert np.isfinite(float(total_ce))
    assert np.isfinite(float(total_dice))
    print("KERNEL_OK")
</pallas_src>

<mosaic_0001>
module attributes {stable_mosaic.version = 11 : i64} {
  func.func @_cost_kernel(%arg0: i32, %arg1: i32, %arg2: memref<1x16x256xbf16, #tpu.memory_space<vmem>>, %arg3: memref<1x16x256xbf16, #tpu.memory_space<vmem>>, %arg4: memref<1x16x6xf32, #tpu.memory_space<vmem>>, %arg5: memref<1x16x6xf32, #tpu.memory_space<vmem>>, %arg6: memref<1x16x16xf32, #tpu.memory_space<vmem>>) attributes {dimension_semantics = [#tpu.dimension_semantics<parallel>, #tpu.dimension_semantics<arbitrary>], iteration_bounds = array<i64: 2, 1>, scalar_prefetch = 0 : i64, scratch_operands = 0 : i64, tpu.core_type = #tpu.core_type<tc>, window_params = [{transform_indices = @transform_0, window_bounds = array<i64: 1, 16, 256>}, {transform_indices = @transform_1, window_bounds = array<i64: 1, 16, 256>}, {transform_indices = @transform_2, window_bounds = array<i64: 1, 16, 6>}, {transform_indices = @transform_3, window_bounds = array<i64: 1, 16, 6>}, {transform_indices = @transform_4, window_bounds = array<i64: 1, 16, 16>}]} {
    %c0_i32 = arith.constant 0 : i32
    %0 = arith.cmpi eq, %arg1, %c0_i32 : i32
    %1 = arith.extui %0 : i1 to i32
    %c0_i32_0 = arith.constant 0 : i32
    %2 = arith.cmpi ne, %1, %c0_i32_0 : i32
    scf.if %2 {
      %cst_18 = arith.constant 0.000000e+00 : f32
      %32 = vector.broadcast %cst_18 : f32 to vector<16x16xf32>
      %c0_19 = arith.constant 0 : index
      %c0_20 = arith.constant 0 : index
      %c0_21 = arith.constant 0 : index
      %33 = vector.load %arg6[%c0_19, %c0_20, %c0_21] : memref<1x16x16xf32, #tpu.memory_space<vmem>>, vector<1x16x16xf32>
      %34 = vector.shape_cast %33 : vector<1x16x16xf32> to vector<16x16xf32>
      %35 = vector.shape_cast %32 : vector<16x16xf32> to vector<1x16x16xf32>
      tpu.vector_store %arg6[%c0_19, %c0_20, %c0_21], %35 {strides = array<i32>} : memref<1x16x16xf32, #tpu.memory_space<vmem>>, vector<1x16x16xf32>,
    } else {
    }
    %c0 = arith.constant 0 : index
    %c0_1 = arith.constant 0 : index
    %c0_2 = arith.constant 0 : index
    %3 = vector.load %arg2[%c0, %c0_1, %c0_2] : memref<1x16x256xbf16, #tpu.memory_space<vmem>>, vector<1x16x256xbf16>
    %4 = vector.shape_cast %3 : vector<1x16x256xbf16> to vector<16x256xbf16>
    %5 = arith.extf %4 : vector<16x256xbf16> to vector<16x256xf32>
    %cst = arith.constant 0.000000e+00 : f32
    %6 = vector.broadcast %cst : f32 to vector<16x256xf32>
    %7 = arith.maximumf %5, %6 : vector<16x256xf32>
    %8 = math.absf %5 : vector<16x256xf32>
    %cst_3 = arith.constant 0.000000e+00 : f32
    %9 = vector.broadcast %cst_3 : f32 to vector<16x256xf32>
    %10 = arith.subf %9, %8 : vector<16x256xf32>
    %11 = math.exp %10 : vector<16x256xf32>
    %cst_4 = arith.constant 1.000000e+00 : f32
    %12 = vector.broadcast %cst_4 : f32 to vector<16x256xf32>
    %13 = arith.addf %12, %11 : vector<16x256xf32>
    %14 = math.log %13 : vector<16x256xf32>
    %15 = arith.addf %7, %14 : vector<16x256xf32>
    %cst_5 = arith.constant dense<0.000000e+00> : vector<16xf32>
    %16 = vector.multi_reduction <add>, %15, %cst_5 [1] : vector<16x256xf32> to vector<16xf32>
    %17 = vector.shape_cast %16 : vector<16xf32> to vector<16x1xf32>
    %c0_6 = arith.constant 0 : index
    %c0_7 = arith.constant 0 : index
    %c0_8 = arith.constant 0 : index
    %18 = vector.load %arg3[%c0_6, %c0_7, %c0_8] : memref<1x16x256xbf16, #tpu.memory_space<vmem>>, vector<1x16x256xbf16>
    %19 = vector.shape_cast %18 : vector<1x16x256xbf16> to vector<16x256xbf16>
    %cst_9 = arith.constant dense<0.000000e+00> : vector<16x16xf32>
    %20 = tpu.matmul %4, %19, %cst_9 {dimension_numbers = #tpu.dot_dimension_numbers<[1], [1], [0], [0], [0, 0, 1, 0], [], []>} : vector<16x256xbf16>, vector<16x256xbf16>, vector<16x16xf32> -> vector<16x16xf32>
    %c0_10 = arith.constant 0 : index
    %c0_11 = arith.constant 0 : index
    %c0_12 = arith.constant 0 : index
    %21 = vector.load %arg6[%c0_10, %c0_11, %c0_12] : memref<1x16x16xf32, #tpu.memory_space<vmem>>, vector<1x16x16xf32>
    %22 = vector.shape_cast %21 : vector<1x16x16xf32> to vector<16x16xf32>
    %23 = vector.broadcast %17 : vector<16x1xf32> to vector<16x16xf32>
    %24 = arith.subf %23, %20 : vector<16x16xf32>
    %25 = arith.addf %22, %24 : vector<16x16xf32>
    %c0_13 = arith.constant 0 : index
    %c0_14 = arith.constant 0 : index
    %c0_15 = arith.constant 0 : index
    %26 = vector.load %arg6[%c0_13, %c0_14, %c0_15] : memref<1x16x16xf32, #tpu.memory_space<vmem>>, vector<1x16x16xf32>
    %27 = vector.shape_cast %26 : vector<1x16x16xf32> to vector<16x16xf32>
    %28 = vector.shape_cast %25 : vector<16x16xf32> to vector<1x16x16xf32>
    tpu.vector_store %arg6[%c0_13, %c0_14, %c0_15], %28 {strides = array<i32>} : memref<1x16x16xf32, #tpu.memory_space<vmem>>, vector<1x16x16xf32>,
    %c0_i32_16 = arith.constant 0 : i32
    %29 = arith.cmpi eq, %arg1, %c0_i32_16 : i32
    %30 = arith.extui %29 : i1 to i32
    %c0_i32_17 = arith.constant 0 : i32
    %31 = arith.cmpi ne, %30, %c0_i32_17 : i32
    scf.if %31 {
      %c0_18 = arith.constant 0 : index
      %c0_19 = arith.constant 0 : index
      %c0_20 = arith.constant 0 : index
      %32 = vector.load %arg4[%c0_18, %c0_19, %c0_20] : memref<1x16x6xf32, #tpu.memory_space<vmem>>, vector<1x16x6xf32>
      %33 = vector.shape_cast %32 : vector<1x16x6xf32> to vector<16x6xf32>
      %cst_21 = arith.constant dense<0xFF800000> : vector<16xf32>
      %34 = vector.multi_reduction <maximumf>, %33, %cst_21 [1] : vector<16x6xf32> to vector<16xf32>
      %35 = vector.shape_cast %34 : vector<16xf32> to vector<16x1xf32>
      %36 = vector.broadcast %35 : vector<16x1xf32> to vector<16x6xf32>
      %37 = arith.subf %33, %36 : vector<16x6xf32>
      %38 = math.exp %37 : vector<16x6xf32>
      %cst_22 = arith.constant dense<0.000000e+00> : vector<16xf32>
      %39 = vector.multi_reduction <add>, %38, %cst_22 [1] : vector<16x6xf32> to vector<16xf32>
      %40 = vector.shape_cast %39 : vector<16xf32> to vector<16x1xf32>
      %41 = vector.broadcast %40 : vector<16x1xf32> to vector<16x6xf32>
      %42 = arith.divf %38, %41 : vector<16x6xf32>
      %c0_23 = arith.constant 0 : index
      %c0_24 = arith.constant 0 : index
      %c0_25 = arith.constant 0 : index
      %43 = vector.load %arg5[%c0_23, %c0_24, %c0_25] : memref<1x16x6xf32, #tpu.memory_space<vmem>>, vector<1x16x6xf32>
      %44 = vector.shape_cast %43 : vector<1x16x6xf32> to vector<16x6xf32>
      %cst_26 = arith.constant dense<0.000000e+00> : vector<16x16xf32>
      %45 = tpu.matmul %42, %44, %cst_26 {dimension_numbers = #tpu.dot_dimension_numbers<[1], [1], [0], [0], [0, 0, 1, 0], [], []>} : vector<16x6xf32>, vector<16x6xf32>, vector<16x16xf32> -> vector<16x16xf32>
      %cst_27 = arith.constant 0.000000e+00 : f32
      %46 = vector.broadcast %cst_27 : f32 to vector<16x16xf32>
      %47 = arith.subf %46, %45 : vector<16x16xf32>
      %c0_28 = arith.constant 0 : index
      %c0_29 = arith.constant 0 : index
      %c0_30 = arith.constant 0 : index
      %48 = vector.load %arg6[%c0_28, %c0_29, %c0_30] : memref<1x16x16xf32, #tpu.memory_space<vmem>>, vector<1x16x16xf32>
      %49 = vector.shape_cast %48 : vector<1x16x16xf32> to vector<16x16xf32>
      %cst_31 = arith.constant 3.906250e-03 : f32
      %50 = vector.broadcast %cst_31 : f32 to vector<16x16xf32>
      %51 = arith.mulf %49, %50 : vector<16x16xf32>
      %52 = arith.addf %51, %47 : vector<16x16xf32>
      %c0_32 = arith.constant 0 : index
      %c0_33 = arith.constant 0 : index
      %c0_34 = arith.constant 0 : index
      %53 = vector.load %arg6[%c0_32, %c0_33, %c0_34] : memref<1x16x16xf32, #tpu.memory_space<vmem>>, vector<1x16x16xf32>
      %54 = vector.shape_cast %53 : vector<1x16x16xf32> to vector<16x16xf32>
      %55 = vector.shape_cast %52 : vector<16x16xf32> to vector<1x16x16xf32>
      tpu.vector_store %arg6[%c0_32, %c0_33, %c0_34], %55 {strides = array<i32>} : memref<1x16x16xf32, #tpu.memory_space<vmem>>, vector<1x16x16xf32>,
    } else {
    }
    return
  }
  func.func @transform_0(%arg0: i32, %arg1: i32) -> (i32, i32, i32) {
    %c0_i32 = arith.constant 0 : i32
    %c0_i32_0 = arith.constant 0 : i32
    return %arg0, %c0_i32, %arg1 : i32, i32, i32
  }
  func.func @transform_1(%arg0: i32, %arg1: i32) -> (i32, i32, i32) {
    %c0_i32 = arith.constant 0 : i32
    %c0_i32_0 = arith.constant 0 : i32
    return %arg0, %c0_i32, %arg1 : i32, i32, i32
  }
  func.func @transform_2(%arg0: i32, %arg1: i32) -> (i32, i32, i32) {
    %c0_i32 = arith.constant 0 : i32
    %c0_i32_0 = arith.constant 0 : i32
    %c0_i32_1 = arith.constant 0 : i32
    return %arg0, %c0_i32, %c0_i32_0 : i32, i32, i32
  }
  func.func @transform_3(%arg0: i32, %arg1: i32) -> (i32, i32, i32) {
    %c0_i32 = arith.constant 0 : i32
    %c0_i32_0 = arith.constant 0 : i32
    %c0_i32_1 = arith.constant 0 : i32
    return %arg0, %c0_i32, %c0_i32_0 : i32, i32, i32
  }
  func.func @transform_4(%arg0: i32, %arg1: i32) -> (i32, i32, i32) {
    %c0_i32 = arith.constant 0 : i32
    %c0_i32_0 = arith.constant 0 : i32
    %c0_i32_1 = arith.constant 0 : i32
    return %arg0, %c0_i32, %c0_i32_0 : i32, i32, i32
  }
}

</mosaic_0001>

<llo_original>
// kernel: tpu_custom_call.1
$region0: #{tpu_custom_call.1}
  #allocation0 [shape = 'u32[]', space=smem, size = 0x4, offset = 0x4, fixed_abs, tag = 'smem constant byte address 0x4 - core index']
  #allocation1 [shape = 'u32[72,128]{1,0:T(1,128)}', space=vmem, size = 0x9000, scoped, tag = 'internal scratch']
  %s0 = inlined_call_operand.vmem [shape: bf16[2,16,256], index: 0, kind: input, shape index: {}]
  %s1 = inlined_call_operand.vmem [shape: bf16[2,16,256], index: 1, kind: input, shape index: {}]
  %s2 = inlined_call_operand.vmem [shape: f32[2,16,6], index: 2, kind: input, shape index: {}]
  %s3 = inlined_call_operand.vmem [shape: f32[2,16,6], index: 3, kind: input, shape index: {}]
  %s4 = inlined_call_operand.hbm [shape: f32[2,16,16], index: 4, kind: output, shape index: {}]
  %s5 = sld [smem:[#allocation0]]
  $region57: #{tpu_custom_call.1} parent=0
    _
  %s7 = ssub.s32 1, %s5
  %s8 = scalar_select 0, %s7, %s5
  $region1: #{tpu_custom_call.1} parent=0
    #allocation2 [shape = 'u8[16384]{0}', space=vmem, size = 0x4000, scoped, tag = 'output window, operand 0']
    #allocation3 [shape = 's32[2]{0}', space=sflag, size = 0x8, scoped, tag = 'scoped memory for tpu_custom_call.1']
    %9 = vsyncpa [#allocation3], 0
    %s10 = scalar_lea.sflag [#allocation3], 1
    %11 = vsyncpa %s10, 0
    loop: start=0, step=1, limit=4
    $region2: #{tpu_custom_call.1} parent=1 // loop_pre_header
      _
    $region3: #{tpu_custom_call.1} parent=1 // loop_header
      %s13 = sphi 0, %s17
      %p14 = scmp.ge.s32.totalorder %s13, 4
      %s20 = sphi 0, %s32
      %s21 = sphi 0, %s28
      %s22 = sphi 0, %s20
      %s23 = sphi 0, %s21
      %s24 = sphi 0, %s22
      %s25 = sphi 0, %s23
      %s37 = sphi 0, %s39
      %s40 = sphi 0, %s37
      %s41 = sphi 0, %s40
      %s57 = sphi 0, %s41
      %s65 = sphi 0, %s67
      %s68 = sphi 0, %s65
      %s69 = sphi 0, %s68
      %s85 = sphi 0, %s69
      %s91 = sphi 0, %s93
      %s94 = sphi 0, %s91
      %s95 = sphi 0, %s94
      %s111 = sphi 0, %s95
      %s117 = sphi 0, %s119
      %s120 = sphi 0, %s117
      %s121 = sphi 0, %s120
      %s137 = sphi 0, %s121
      %s143 = sphi 0, %s145
      %s146 = sphi 0, %s143
      %s147 = sphi 0, %s146
      %s163 = sphi 0, %s147
    $region4: #{tpu_custom_call.1} parent=1 // loop_header_branch
      %16 = sbr.rel (%p14) target = $region8
    $region5: #{tpu_custom_call.1} parent=1 // loop_body
      %s18 = ssub.s32 %s13, 1
      %s19 = ssub.s32 %s13, 2
      %s26 = sadd.s32 1, %s21
      %p27 = scmp.ge.s32.totalorder %s26, 1
      %s28 = scalar_select %p27, 0, %s26
      %s29 = sadd.s32 1, %s20
      %s30 = scalar_select %p27, %s29, %s20
      %p31 = scmp.ge.s32.totalorder %s30, 2
      %s32 = scalar_select %p31, 0, %s30
      %s33 = ssub.s32 %s20, %s32
      %s34 = ssub.s32 %s21, %s28
      %s35 = sor.u32 %s33, %s34
      %p36 = scmp.eq.s32.totalorder %s35, 0
      %s38 = sadd.s32 %s37, 1
      %s39 = scalar_select %p36, %s37, %s38
      %p42 = pneg %p36
      %p43 = scmp.eq.s32.totalorder %s13, 1
      %p44 = por %p42, %p43
      %p45 = scmp.ne.s32.totalorder %s37, %s40
      %p46 = scmp.eq.s32.totalorder %s13, 0
      %p47 = por %p45, %p46
      %p48 = scmp.ne.s32.totalorder %s37, %s40
      %p49 = scmp.eq.s32.totalorder %s18, 1
      %p50 = por %p48, %p49
      %p51 = scmp.ne.s32.totalorder %s40, %s41
      %p52 = scmp.eq.s32.totalorder %s18, 0
      %p53 = por %p51, %p52
      %p54 = scmp.ne.s32.totalorder %s40, %s41
      %p55 = scmp.eq.s32.totalorder %s19, 1
      %p56 = por %p54, %p55
      %p58 = scmp.ne.s32.totalorder %s41, %s57
      %p59 = scmp.eq.s32.totalorder %s19, 0
      %p60 = por %p58, %p59
      %s61 = ssub.s32 %s20, %s32
      %s62 = ssub.s32 %s21, %s28
      %s63 = sor.u32 %s61, %s62
      %p64 = scmp.eq.s32.totalorder %s63, 0
      %s66 = sadd.s32 %s65, 1
      %s67 = scalar_select %p64, %s65, %s66
      %p70 = pneg %p64
      %p71 = scmp.eq.s32.totalorder %s13, 1
      %p72 = por %p70, %p71
      %p73 = scmp.ne.s32.totalorder %s65, %s68
      %p74 = scmp.eq.s32.totalorder %s13, 0
      %p75 = por %p73, %p74
      %p76 = scmp.ne.s32.totalorder %s65, %s68
      %p77 = scmp.eq.s32.totalorder %s18, 1
      %p78 = por %p76, %p77
      %p79 = scmp.ne.s32.totalorder %s68, %s69
      %p80 = scmp.eq.s32.totalorder %s18, 0
      %p81 = por %p79, %p80
      %p82 = scmp.ne.s32.totalorder %s68, %s69
      %p83 = scmp.eq.s32.totalorder %s19, 1
      %p84 = por %p82, %p83
      %p86 = scmp.ne.s32.totalorder %s69, %s85
      %p87 = scmp.eq.s32.totalorder %s19, 0
      %p88 = por %p86, %p87
      %s89 = ssub.s32 %s20, %s32
      %p90 = scmp.eq.s32.totalorder %s89, 0
      %s92 = sadd.s32 %s91, 1
      %s93 = scalar_select %p90, %s91, %s92
      %p96 = pneg %p90
      %p97 = scmp.eq.s32.totalorder %s13, 1
      %p98 = por %p96, %p97
      %p99 = scmp.ne.s32.totalorder %s91, %s94
      %p100 = scmp.eq.s32.totalorder %s13, 0
      %p101 = por %p99, %p100
      %p102 = scmp.ne.s32.totalorder %s91, %s94
      %p103 = scmp.eq.s32.totalorder %s18, 1
      %p104 = por %p102, %p103
      %p105 = scmp.ne.s32.totalorder %s94, %s95
      %p106 = scmp.eq.s32.totalorder %s18, 0
      %p107 = por %p105, %p106
      %p108 = scmp.ne.s32.totalorder %s94, %s95
      %p109 = scmp.eq.s32.totalorder %s19, 1
      %p110 = por %p108, %p109
      %p112 = scmp.ne.s32.totalorder %s95, %s111
      %p113 = scmp.eq.s32.totalorder %s19, 0
      %p114 = por %p112, %p113
      %s115 = ssub.s32 %s20, %s32
      %p116 = scmp.eq.s32.totalorder %s115, 0
      %s118 = sadd.s32 %s117, 1
      %s119 = scalar_select %p116, %s117, %s118
      %p122 = pneg %p116
      %p123 = scmp.eq.s32.totalorder %s13, 1
      %p124 = por %p122, %p123
      %p125 = scmp.ne.s32.totalorder %s117, %s120
      %p126 = scmp.eq.s32.totalorder %s13, 0
      %p127 = por %p125, %p126
      %p128 = scmp.ne.s32.totalorder %s117, %s120
      %p129 = scmp.eq.s32.totalorder %s18, 1
      %p130 = por %p128, %p129
      %p131 = scmp.ne.s32.totalorder %s120, %s121
      %p132 = scmp.eq.s32.totalorder %s18, 0
      %p133 = por %p131, %p132
      %p134 = scmp.ne.s32.totalorder %s120, %s121
      %p135 = scmp.eq.s32.totalorder %s19, 1
      %p136 = por %p134, %p135
      %p138 = scmp.ne.s32.totalorder %s121, %s137
      %p139 = scmp.eq.s32.totalorder %s19, 0
      %p140 = por %p138, %p139
      %s141 = ssub.s32 %s20, %s32
      %p142 = scmp.eq.s32.totalorder %s141, 0
      %s144 = sadd.s32 %s143, 1
      %s145 = scalar_select %p142, %s143, %s144
      %p148 = pneg %p142
      %p149 = scmp.eq.s32.totalorder %s13, 1
      %p150 = por %p148, %p149
      %p151 = scmp.ne.s32.totalorder %s143, %s146
      %p152 = scmp.eq.s32.totalorder %s13, 0
      %p153 = por %p151, %p152
      %p154 = scmp.ne.s32.totalorder %s143, %s146
      %p155 = scmp.eq.s32.totalorder %s18, 1
      %p156 = por %p154, %p155
      %p157 = scmp.ne.s32.totalorder %s146, %s147
      %p158 = scmp.eq.s32.totalorder %s18, 0
      %p159 = por %p157, %p158
      %p160 = scmp.ne.s32.totalorder %s146, %s147
      %p161 = scmp.eq.s32.totalorder %s19, 1
      %p162 = por %p160, %p161
      %p164 = scmp.ne.s32.totalorder %s147, %s163
      %p165 = scmp.eq.s32.totalorder %s19, 0
      %p166 = por %p164, %p165
      %p167 = scmp.le.s32.totalorder 1, %s13
      %p168 = scmp.lt.s32.totalorder %s13, 3
      %p169 = pnand %p167, %p168
      %p170 = pneg %p169
      // Predicated region
      $region9: #{tpu_custom_call.1} parent=5 // pred_check
        _
      $region10: #{tpu_custom_call.1} parent=5 // pred_check_branch
        %172 = sbr.rel (%p169) target = $region12
      $region11: #{tpu_custom_call.1} parent=5 // pred_region
        %s173 = ssub.s32 %s13, 1
      $region12: #{tpu_custom_call.1} parent=5 // pred_fallthru
        _
      %p174 = scmp.lt.s32.totalorder %s13, 2
      // Predicated region
      $region13: #{tpu_custom_call.1} parent=5 // pred_check
        %p175 = pneg %p174
      $region14: #{tpu_custom_call.1} parent=5 // pred_check_branch
        %177 = sbr.rel (%p175) target = $region16
      $region15: #{tpu_custom_call.1} parent=5 // pred_region
        // Predicated region
        $region17: #{tpu_custom_call.1} parent=15 // pred_check
          %p178 = pneg %p47
        $region18: #{tpu_custom_call.1} parent=15 // pred_check_branch
          %180 = sbr.rel (%p178) target = $region20
        $region19: #{tpu_custom_call.1} parent=15 // pred_region
          %s181 = smul.u32 2, %s21
          %p182 = scmp.lt.s32.totalorder %s20, 1
          %s183 = scalar_select %p182, %s20, 1
          %p184 = scmp.lt.s32.totalorder %s181, 1
          %s185 = scalar_select %p184, %s181, 1
          %s186 = smul.addr %s183, 4
          %s187 = sadd.s32 %s185, %s186
          %s188 = smul.addr %s187, 4
          %s189 = scalar_lea.vmem %s0, %s188
          %s190 = smul.u32 2, %s21
        $region20: #{tpu_custom_call.1} parent=15 // pred_fallthru
          _
        // Predicated region
        $region21: #{tpu_custom_call.1} parent=15 // pred_check
          %p191 = pneg %p75
        $region22: #{tpu_custom_call.1} parent=15 // pred_check_branch
          %193 = sbr.rel (%p191) target = $region24
        $region23: #{tpu_custom_call.1} parent=15 // pred_region
          %s194 = smul.u32 2, %s21
          %p195 = scmp.lt.s32.totalorder %s20, 1
          %s196 = scalar_select %p195, %s20, 1
          %p197 = scmp.lt.s32.totalorder %s194, 1
          %s198 = scalar_select %p197, %s194, 1
          %s199 = smul.addr %s196, 4
          %s200 = sadd.s32 %s198, %s199
          %s201 = smul.addr %s200, 4
          %s202 = scalar_lea.vmem %s1, %s201
          %s203 = smul.u32 2, %s21
        $region24: #{tpu_custom_call.1} parent=15 // pred_fallthru
          _
        // Predicated region
        $region25: #{tpu_custom_call.1} parent=15 // pred_check
          %p204 = pneg %p101
        $region26: #{tpu_custom_call.1} parent=15 // pred_check_branch
          %206 = sbr.rel (%p204) target = $region28
        $region27: #{tpu_custom_call.1} parent=15 // pred_region
          %p207 = scmp.lt.s32.totalorder %s20, 1
          %s208 = scalar_select %p207, %s20, 1
          %s209 = smul.addr %s208, 2
          %s210 = smul.addr %s209, 8
          %s211 = scalar_lea.vmem %s2, %s210
        $region28: #{tpu_custom_call.1} parent=15 // pred_fallthru
          _
        // Predicated region
        $region29: #{tpu_custom_call.1} parent=15 // pred_check
          %p212 = pneg %p127
        $region30: #{tpu_custom_call.1} parent=15 // pred_check_branch
          %214 = sbr.rel (%p212) target = $region32
        $region31: #{tpu_custom_call.1} parent=15 // pred_region
          %p215 = scmp.lt.s32.totalorder %s20, 1
          %s216 = scalar_select %p215, %s20, 1
          %s217 = smul.addr %s216, 2
          %s218 = smul.addr %s217, 8
          %s219 = scalar_lea.vmem %s3, %s218
        $region32: #{tpu_custom_call.1} parent=15 // pred_fallthru
          _
      $region16: #{tpu_custom_call.1} parent=5 // pred_fallthru
        _
      %p220 = scmp.le.s32.totalorder 1, %s13
      %p221 = scmp.lt.s32.totalorder %s13, 3
      %p222 = pnand %p220, %p221
      %p223 = pneg %p222
      // Predicated region
      $region33: #{tpu_custom_call.1} parent=5 // pred_check
        _
      $region34: #{tpu_custom_call.1} parent=5 // pred_check_branch
        %225 = sbr.rel (%p222) target = $region36
      $region35: #{tpu_custom_call.1} parent=5 // pred_region
        %s226 = ssub.s32 %s13, 1
        %s227 = smul.u32 2, %s23
        %p228 = scmp.lt.s32.totalorder %s22, 1
        %s229 = scalar_select %p228, %s22, 1
        %p230 = scmp.lt.s32.totalorder %s227, 1
        %s231 = scalar_select %p230, %s227, 1
        %s232 = smul.addr %s229, 4
        %s233 = sadd.s32 %s231, %s232
        %s234 = smul.addr %s233, 4
        %s235 = scalar_lea.vmem %s0, %s234
        %p236 = pneg %p53
        %p237 = pneg %p50
        %s238 = smul.u32 2, %s23
        %p239 = scmp.lt.s32.totalorder %s22, 1
        %s240 = scalar_select %p239, %s22, 1
        %p241 = scmp.lt.s32.totalorder %s238, 1
        %s242 = scalar_select %p241, %s238, 1
        %s243 = smul.addr %s240, 4
        %s244 = sadd.s32 %s242, %s243
        %s245 = smul.addr %s244, 4
        %s246 = scalar_lea.vmem %s1, %s245
        %p247 = pneg %p81
        %p248 = pneg %p78
        %p249 = scmp.lt.s32.totalorder %s22, 1
        %s250 = scalar_select %p249, %s22, 1
        %s251 = smul.addr %s250, 2
        %s252 = smul.addr %s251, 8
        %s253 = scalar_lea.vmem %s2, %s252
        %p254 = pneg %p107
        %p255 = pneg %p104
        %p256 = scmp.lt.s32.totalorder %s22, 1
        %s257 = scalar_select %p256, %s22, 1
        %s258 = smul.addr %s257, 2
        %s259 = smul.addr %s258, 8
        %s260 = scalar_lea.vmem %s3, %s259
        %p261 = pneg %p133
        %p262 = pneg %p130
        %p263 = pneg %p159
        %p264 = pneg %p156
        %s265 = sand.u32 %s146, 1
        %s266 = scalar_lea.sflag [#allocation3], %s265
        %s267 = sand.u32 %s146, 1
        %s268 = smul.addr %s267, 16
        %s269 = scalar_lea.vmem [#allocation2], %s268
        %s270 = smul.u32 2, %s23
        %p271 = scmp.lt.s32.totalorder %s22, 1
        %s272 = scalar_select %p271, %s22, 1
        %p273 = scmp.lt.s32.totalorder %s270, 1
        %s274 = scalar_select %p273, %s270, 1
        %s275 = smul.addr %s272, 4
        %s276 = sadd.s32 %s274, %s275
        %s277 = smul.addr %s276, 4
        %s278 = scalar_lea.vmem %s0, %s277
        %s279 = smul.u32 2, %s23
        %s280 = smul.u32 2, %s23
        %p281 = scmp.lt.s32.totalorder %s22, 1
        %s282 = scalar_select %p281, %s22, 1
        %p283 = scmp.lt.s32.totalorder %s280, 1
        %s284 = scalar_select %p283, %s280, 1
        %s285 = smul.addr %s282, 4
        %s286 = sadd.s32 %s284, %s285
        %s287 = smul.addr %s286, 4
        %s288 = scalar_lea.vmem %s1, %s287
        %s289 = smul.u32 2, %s23
        %p290 = scmp.lt.s32.totalorder %s22, 1
        %s291 = scalar_select %p290, %s22, 1
        %s292 = smul.addr %s291, 2
        %s293 = smul.addr %s292, 8
        %s294 = scalar_lea.vmem %s2, %s293
        %p295 = scmp.lt.s32.totalorder %s22, 1
        %s296 = scalar_select %p295, %s22, 1
        %s297 = smul.addr %s296, 2
        %s298 = smul.addr %s297, 8
        %s299 = scalar_lea.vmem %s3, %s298
        %p301 = scmp.eq.s32.totalorder %s23, 0
        // Predicated region
        $region37: #{tpu_custom_call.1} parent=35 // pred_check
          %p302 = pneg %p301
        $region38: #{tpu_custom_call.1} parent=35 // pred_check_branch
          %304 = sbr.rel (%p302) target = $region40
        $region39: #{tpu_custom_call.1} parent=35 // pred_region
          %vm305 = vcmask 130048
          %306 = vst.msk [vmem:[%s269] sm:$0xff] %vm305, 0.0
          %307 = vst.msk [vmem:[%s269 + $0x8] sm:$0xff] %vm305, 0.0
        $region40: #{tpu_custom_call.1} parent=35 // pred_fallthru
          _
        %v308 = vld [vmem:[%s278] sm:$0xff]
        %v309 = vld [vmem:[%s278 + $0x8] sm:$0xff]
        %v310 = vunpack.c.l.bf16 %v308
        %v311 = vunpack.c.h.bf16 %v308
        %v312 = vunpack.c.l.bf16 %v309
        %v313 = vunpack.c.h.bf16 %v309
        %v314 = vmax.f32 %v310, 0.0
        %v315 = vmax.f32 %v311, 0.0
        %v316 = vmax.f32 %v312, 0.0
        %v317 = vmax.f32 %v313, 0.0
        %v318 = vand.u32 2147483647, %v310
        %v319 = vand.u32 2147483647, %v311
        %v320 = vand.u32 2147483647, %v312
        %v321 = vand.u32 2147483647, %v313
        %v322 = vsub.f32 0.0, %v318
        %v323 = vsub.f32 0.0, %v319
        %v324 = vsub.f32 0.0, %v320
        %v325 = vsub.f32 0.0, %v321
        %v326 = vmul.f32 %v322, 1.442695
        %v327 = vpow.pop %v326
        %v328 = vmul.f32 %v323, 1.442695
        %v329 = vpow.pop %v328
        %v330 = vmul.f32 %v324, 1.442695
        %v331 = vpow.pop %v330
        %v332 = vmul.f32 %v325, 1.442695
        %v333 = vpow.pop %v332
        %v334 = vadd.f32 %v327, 1.0
        %v335 = vadd.f32 %v329, 1.0
        %v336 = vadd.f32 %v331, 1.0
        %v337 = vadd.f32 %v333, 1.0
        %v338 = vlog2.pop %v334
        %v339 = vmul.f32 %v338, 0.6931472
        %v340 = vlog2.pop %v335
        %v341 = vmul.f32 %v340, 0.6931472
        %v342 = vlog2.pop %v336
        %v343 = vmul.f32 %v342, 0.6931472
        %v344 = vlog2.pop %v337
        %v345 = vmul.f32 %v344, 0.6931472
        %v346 = vadd.f32 %v314, %v339
        %v347 = vadd.f32 %v315, %v341
        %v348 = vadd.f32 %v316, %v343
        %v349 = vadd.f32 %v317, %v345
        %v350 = vadd.f32 %v346, %v347
        %351 = vadd.xlane.f32.xlu0 %v350
        %v352 = vpop.xlane.xlu0 %351
        %v353 = vadd.f32 %v348, %v349
        %354 = vadd.xlane.f32.xlu0 %v353
        %v355 = vpop.xlane.xlu0 %354
        %v356 = vld [vmem:[%s288] sm:$0xff]
        %v357 = vld [vmem:[%s288 + $0x8] sm:$0xff]
        %v360 = vunpack.c.l.b16 %v308
        %v361 = vunpack.c.h.b16 %v308
        %v362 = vunpack.c.l.b16 %v309
        %v363 = vunpack.c.h.b16 %v309
        %v364 = vpack.c.b16 %v362, %v360
        %v365 = vpack.c.b16 %v363, %v361
        %v370 = vunpack.c.l.b16 %v356
        %v371 = vunpack.c.h.b16 %v356
        %v372 = vunpack.c.l.b16 %v357
        %v373 = vunpack.c.h.b16 %v357
        %v374 = vpack.c.b16 %v372, %v370
        %v375 = vpack.c.b16 %v373, %v371
        %378 = vmatpush.bf16.xpose.msra.mxu0 0
        %379 = vmatpush.bf16.xpose.msra.mxu0 0
        %380 = vmatpush.bf16.xpose.msra.mxu0 0
        %381 = vmatpush.bf16.xpose.msra.mxu0 0
        %382 = vmatpush.bf16.xpose.msra.mxu0 0
        %383 = vmatpush.bf16.xpose.msra.mxu0 0
        %384 = vmatpush.bf16.xpose.msra.mxu0 0
        %385 = vmatpush.bf16.xpose.msra.mxu0 %v374
        %386 = vmatmul.bf16.gmra.mxu0 %v364
        %v387 = vpop.f32.mrf.mxu0
        %v388 = vadd.f32 0.0, %v387
        %v389 = vpop.f32.mrf.mxu0
        %v390 = vadd.f32 0.0, %v389
        %391 = vdwg.mxu0
        %392 = vmatpush.bf16.xpose.msra.mxu0 0
        %393 = vmatpush.bf16.xpose.msra.mxu0 0
        %394 = vmatpush.bf16.xpose.msra.mxu0 0
        %395 = vmatpush.bf16.xpose.msra.mxu0 0
        %396 = vmatpush.bf16.xpose.msra.mxu0 0
        %397 = vmatpush.bf16.xpose.msra.mxu0 0
        %398 = vmatpush.bf16.xpose.msra.mxu0 0
        %399 = vmatpush.bf16.xpose.msra.mxu0 %v375
        %400 = vmatmul.bf16.gmra.mxu0 %v365
        %v401 = vpop.f32.mrf.mxu0
        %v402 = vadd.f32 %v388, %v401
        %v403 = vpop.f32.mrf.mxu0
        %v404 = vadd.f32 %v390, %v403
        %405 = vdwg.mxu0
        %v406 = vld [vmem:[%s269] sm:$0xff]
        %v407 = vld [vmem:[%s269 + $0x8] sm:$0xff]
        %v408 = vsub.f32 %v352, %v402
        %v409 = vsub.f32 %v355, %v404
        %v410 = vadd.f32 %v406, %v408
        %v411 = vadd.f32 %v407, %v409
        %vm412 = vcmask 130048
        %413 = vst.msk [vmem:[%s269] sm:$0xff] %vm412, %v410
        %414 = vst.msk [vmem:[%s269 + $0x8] sm:$0xff] %vm412, %v411
        // Predicated region
        $region41: #{tpu_custom_call.1} parent=35 // pred_check
          %p415 = pneg %p301
        $region42: #{tpu_custom_call.1} parent=35 // pred_check_branch
          %417 = sbr.rel (%p415) target = $region44
        $region43: #{tpu_custom_call.1} parent=35 // pred_region
          %v418 = vld [vmem:[%s294] sm:$0xff]
          %v419 = vld [vmem:[%s294 + $0x8] sm:$0xff]
          %vm420 = vcmask 48128
          %v421 = vsel %vm420, %v418, -inf
          %422 = vmax.xlane.f32.xlu0 %v421
          %v423 = vpop.xlane.xlu0 %422
          %v424 = vsel %vm420, %v419, -inf
          %425 = vmax.xlane.f32.xlu0 %v424
          %v426 = vpop.xlane.xlu0 %425
          %v427 = vsub.f32 %v418, %v423
          %v428 = vsub.f32 %v419, %v426
          %v429 = vmul.f32 %v427, 1.442695
          %v430 = vpow.pop %v429
          %v431 = vmul.f32 %v428, 1.442695
          %v432 = vpow.pop %v431
          %v433 = vsel %vm420, %v430, 0.0
          %434 = vadd.xlane.f32.xlu0 %v433
          %v435 = vpop.xlane.xlu0 %434
          %v436 = vsel %vm420, %v432, 0.0
          %437 = vadd.xlane.f32.xlu0 %v436
          %v438 = vpop.xlane.xlu0 %437
          %v439 = vrcp.pop %v435
          %v440 = vmul.f32 %v435, %v439
          %v441 = vsub.f32 1.0, %v440
          %v442 = vmul.f32 %v439, %v441
          %v443 = vadd.f32 %v439, %v442
          %vm444 = vweird.f32 %v435
          %vm445 = vweird.f32 %v439
          %vm446 = vmor %vm444, %vm445
          %v447 = vsel %vm446, %v439, %v443
          %v448 = vand.u32 2147483647, %v435
          %vm449 = vcmp.eq.f32.partialorder %v448, 8.507059e+37
          %v450 = vand.u32 %v435, 2147483648
          %v451 = vor.u32 1.1754944e-38, %v450
          %v452 = vsel %vm449, %v451, %v447
          %v453 = vmul.f32 %v430, %v452
          %v454 = vrcp.pop %v438
          %v455 = vmul.f32 %v438, %v454
          %v456 = vsub.f32 1.0, %v455
          %v457 = vmul.f32 %v454, %v456
          %v458 = vadd.f32 %v454, %v457
          %vm459 = vweird.f32 %v438
          %vm460 = vweird.f32 %v454
          %vm461 = vmor %vm459, %vm460
          %v462 = vsel %vm461, %v454, %v458
          %v463 = vand.u32 2147483647, %v438
          %vm464 = vcmp.eq.f32.partialorder %v463, 8.507059e+37
          %v465 = vand.u32 %v438, 2147483648
          %v466 = vor.u32 1.1754944e-38, %v465
          %v467 = vsel %vm464, %v466, %v462
          %v468 = vmul.f32 %v432, %v467
          %v469 = vld [vmem:[%s299] sm:$0xff]
          %v470 = vld [vmem:[%s299 + $0x8] sm:$0xff]
          %v472 = vsel %vm420, %v453, 0
          %v475 = vsel %vm420, %v468, 0
          %v478 = vsel %vm420, %v469, 0
          %v481 = vsel %vm420, %v470, 0
          %483 = vmatpush.xpose.msra.mxu0 0.0
          %484 = vmatpush.xpose.msra.mxu0 0.0
          %485 = vmatpush.xpose.msra.mxu0 0.0
          %486 = vmatpush.xpose.msra.mxu0 0.0
          %487 = vmatpush.xpose.msra.mxu0 0.0
          %488 = vmatpush.xpose.msra.mxu0 0.0
          %489 = vmatpush.xpose.msra.mxu0 0.0
          %490 = vmatpush.xpose.msra.mxu0 0.0
          %491 = vmatpush.xpose.msra.mxu0 0.0
          %492 = vmatpush.xpose.msra.mxu0 0.0
          %493 = vmatpush.xpose.msra.mxu0 0.0
          %494 = vmatpush.xpose.msra.mxu0 0.0
          %495 = vmatpush.xpose.msra.mxu0 0.0
          %496 = vmatpush.xpose.msra.mxu0 0.0
          %497 = vmatpush.xpose.msra.mxu0 %v481
          %498 = vmatpush.xpose.msra.mxu0 %v478
          %499 = vmatmul.f32.gmra.mxu0 %v472
          %v500 = vpop.f32.mrf.mxu0
          %v501 = vadd.f32 0.0, %v500
          %502 = vmatmul.f32.gmra.mxu0 %v475
          %v503 = vpop.f32.mrf.mxu0
          %v504 = vadd.f32 0.0, %v503
          %505 = vdwg.mxu0
          %v506 = vsub.f32 0.0, %v501
          %v507 = vsub.f32 0.0, %v504
          %v508 = vld [vmem:[%s269] sm:$0xff]
          %v509 = vld [vmem:[%s269 + $0x8] sm:$0xff]
          %v510 = vmul.f32 %v508, 0.00390625
          %v511 = vmul.f32 %v509, 0.00390625
          %v512 = vadd.f32 %v510, %v506
          %v513 = vadd.f32 %v511, %v507
          %514 = vst.msk [vmem:[%s269] sm:$0xff] %vm412, %v512
          %515 = vst.msk [vmem:[%s269 + $0x8] sm:$0xff] %vm412, %v513
        $region44: #{tpu_custom_call.1} parent=35 // pred_fallthru
          _
        %s516 = sand.u32 %s146, 1
        %s517 = scalar_lea.sflag [#allocation3], %s516
        %s518 = sand.u32 %s146, 1
        %s519 = smul.addr %s518, 16
        %s520 = scalar_lea.vmem [#allocation2], %s519
        // Predicated region
        $region45: #{tpu_custom_call.1} parent=35 // pred_check
          %p521 = pneg %p156
        $region46: #{tpu_custom_call.1} parent=35 // pred_check_branch
          %523 = sbr.rel (%p521) target = $region48
        $region47: #{tpu_custom_call.1} parent=35 // pred_region
          %525 = vsyncadd %s517, 0
          %s526 = smul.addr %s22, 2
          %s527 = smul.addr %s526, 8
          %s528 = scalar_lea.hbm %s4, %s527
          %s529 = sshll.u32 %s520, 4
          %s530 = int_to_ptr.vmem [resolvable:$true] %s529
          %s531 = sshll.u32 %s528, 4
          %s532 = int_to_ptr.hbm [resolvable:$true] %s531
          %537 = dma.vmem_to_hbm [thread:$0]  %s530, 256, %s532, %s517, 128, 128, 8
        $region48: #{tpu_custom_call.1} parent=35 // pred_fallthru
          _
      $region36: #{tpu_custom_call.1} parent=5 // pred_fallthru
        _
      %p538 = scmp.le.s32.totalorder 2, %s13
      // Predicated region
      $region49: #{tpu_custom_call.1} parent=5 // pred_check
        %p539 = pneg %p538
      $region50: #{tpu_custom_call.1} parent=5 // pred_check_branch
        %541 = sbr.rel (%p539) target = $region52
      $region51: #{tpu_custom_call.1} parent=5 // pred_region
        %s542 = ssub.s32 %s13, 2
        // Predicated region
        $region53: #{tpu_custom_call.1} parent=51 // pred_check
          %p543 = pneg %p162
        $region54: #{tpu_custom_call.1} parent=51 // pred_check_branch
          %545 = sbr.rel (%p543) target = $region56
        $region55: #{tpu_custom_call.1} parent=51 // pred_region
          %s546 = sand.u32 %s147, 1
          %s547 = scalar_lea.sflag [#allocation3], %s546
          %s548 = sand.u32 %s147, 1
          %s549 = smul.addr %s548, 16
          %s550 = scalar_lea.vmem [#allocation2], %s549
          %552 = dma.done %s547, 256
        $region56: #{tpu_custom_call.1} parent=51 // pred_fallthru
          _
      $region52: #{tpu_custom_call.1} parent=5 // pred_fallthru
        _
    $region6: #{tpu_custom_call.1} parent=1 // loop_footer
      %s17 = sadd.s32 1, %s13
    $region7: #{tpu_custom_call.1} parent=1 // loop_footer_branch
      %12 = sbr.rel target = $region3
    $region8: #{tpu_custom_call.1} parent=1 // loop_exit
      _
    %553 = vsyncpa [#allocation3], 1
    %s554 = scalar_lea.sflag [#allocation3], 1
    %555 = vsyncpa %s554, 1

</llo_original>
